<compile_context>
chip_gen: v7x
topology: tpu7x:2x2x1
jax: 0.10.0
libtpu: 0.0.40
codegen_flags: <defaults>
</compile_context>

<pallas_src>
import math
import functools

import jax
import jax.numpy as jnp
from jax import lax
from jax.experimental import pallas as pl
from jax.experimental.pallas import tpu as pltpu


# ------------------------------ in-kernel step ------------------------------ #

def _lstm_stack_step(x, hs, cs, w_ih, w_hh, b, *, hidden_size):
    """One LSTM-stack step on values (vregs), not refs.

    x      : [Bp, D]  f32 input, zero-padded to D = max(input_size, H) lanes
    hs, cs : tuples (len L) of [Bp, H] f32
    w_ih   : tuple of [D, 4H] bf16;  w_hh : tuple of [H, 4H] bf16
    b      : tuple of [1, 4H] f32  (b_ih + b_hh)
    """
    H = hidden_size
    D = w_ih[0].shape[0]
    layer_in = x
    new_hs, new_cs = [], []
    for l in range(len(hs)):
        # Two MXU dots (no fused-operand scratch, no masked sub-slice stores).
        gates = (jnp.dot(layer_in.astype(jnp.bfloat16), w_ih[l],
                         preferred_element_type=jnp.float32)
                 + jnp.dot(hs[l].astype(jnp.bfloat16), w_hh[l],
                           preferred_element_type=jnp.float32)
                 + b[l])                                   # [Bp, 4H]
        # Two full-vreg EUP passes over the 128-lane gates tile, then slice.
        sig = jax.nn.sigmoid(gates)
        th = jnp.tanh(gates)
        i = sig[:, 0 * H:1 * H]
        f = sig[:, 1 * H:2 * H]
        g = th[:, 2 * H:3 * H]
        o = sig[:, 3 * H:4 * H]
        c_new = f * cs[l] + i * g
        h_new = o * jnp.tanh(c_new)
        new_hs.append(h_new)
        new_cs.append(c_new)
        if l + 1 < len(hs):
            if D > H:   # only when input_size > hidden_size; padded weight rows are zero
                layer_in = jnp.concatenate(
                    [h_new, jnp.zeros((h_new.shape[0], D - H), h_new.dtype)], axis=1)
            else:
                layer_in = h_new
    return tuple(new_hs), tuple(new_cs)


# ------------------------------ Pallas kernel ------------------------------- #

def _decoder_decode_kernel(x_ref, h_ref, c_ref, w_ih_ref, w_hh_ref, b_ref,
                           wlin_ref, blin_ref,
                           preds_ref, h_out_ref, c_out_ref,
                           *, num_layers, hidden_size, input_size, num_steps):
    """Fused autoregressive decode: num_steps x (L LSTM cells + linear head).

    x_ref    : [Bp, D]              (D = max(input_size, H); zero-padded lanes)
    h_ref    : [L, Bp, H]  f32      c_ref : [L, Bp, H] f32
    w_ih_ref : [L, D, 4H]  bf16     w_hh_ref : [L, H, 4H] bf16
    b_ref    : [L, 1, 4H]  f32
    wlin_ref : [H, out_pad] bf16    blin_ref : [1, out_pad] f32
    preds_ref: [num_steps, Bp, out_pad] f32 (lane-dense)
    h_out/c_out : [L, Bp, H] f32
    """
    L, H = num_layers, hidden_size
    D = w_ih_ref.shape[1]

    # Hoist all weight loads out of the time loop: VMEM/vreg resident across steps.
    w_ih = tuple(w_ih_ref[l] for l in range(L))
    w_hh = tuple(w_hh_ref[l] for l in range(L))
    b = tuple(b_ref[l] for l in range(L))
    w_lin = wlin_ref[...]
    b_lin = blin_ref[...]

    def step(t, carry):
        x, hs, cs = carry
        hs, cs = _lstm_stack_step(x, hs, cs, w_ih, w_hh, b, hidden_size=H)
        pred = (jnp.dot(hs[-1].astype(jnp.bfloat16), w_lin,
                        preferred_element_type=jnp.float32) + b_lin)  # [Bp, out_pad]
        preds_ref[t] = pred                       # lane-dense (128-wide), unmasked store
        # Feed the prediction back as the next step's input. Lanes
        # [input_size, out_pad) of `pred` are exactly zero (zero-padded head
        # weights/bias), so pred[:, :D] is already the zero-padded [Bp, D] input.
        if D <= pred.shape[1]:
            x_next = pred[:, :D]
        else:
            x_next = jnp.concatenate(
                [pred[:, :input_size],
                 jnp.zeros((pred.shape[0], D - input_size), pred.dtype)], axis=1)
        return x_next, hs, cs

    hs0 = tuple(h_ref[l] for l in range(L))
    cs0 = tuple(c_ref[l] for l in range(L))
    carry = (x_ref[...], hs0, cs0)

    if num_steps <= 8:
        # Short fixed trip count: static unroll (full LLO scheduling visibility).
        for t in range(num_steps):
            carry = step(t, carry)
    else:
        carry = lax.fori_loop(0, num_steps, step, carry)

    _, hs_f, cs_f = carry
    for l in range(L):
        h_out_ref[l] = hs_f[l]
        c_out_ref[l] = cs_f[l]


# ------------------------------ param packing ------------------------------- #

def init_decoder_params(key, input_size, hidden_size, num_layers):
    """PyTorch-style uniform(-1/sqrt(H), 1/sqrt(H)) init, packed for the kernel."""
    H = hidden_size
    D = max(input_size, hidden_size)               # common lane width of layer inputs
    out_pad = ((input_size + 127) // 128) * 128    # lane-dense head output
    k = 1.0 / math.sqrt(H)

    w_ih_layers, w_hh_layers, b_layers = [], [], []
    for layer in range(num_layers):
        in_dim = input_size if layer == 0 else H
        key, k1, k2, k3, k4 = jax.random.split(key, 5)
        w_ih = jax.random.uniform(k1, (4 * H, in_dim), jnp.float32, -k, k)
        w_hh = jax.random.uniform(k2, (4 * H, H), jnp.float32, -k, k)
        b_ih = jax.random.uniform(k3, (4 * H,), jnp.float32, -k, k)
        b_hh = jax.random.uniform(k4, (4 * H,), jnp.float32, -k, k)
        w_ih_layers.append(jnp.pad(w_ih.T, ((0, D - in_dim), (0, 0))))   # [D, 4H], zero pad rows
        w_hh_layers.append(w_hh.T)                                       # [H, 4H]
        b_layers.append((b_ih + b_hh).reshape(1, -1))                    # [1, 4H]

    key, k1, k2 = jax.random.split(key, 3)
    w_lin = jax.random.uniform(k1, (input_size, H), jnp.float32, -k, k)
    b_lin = jax.random.uniform(k2, (input_size,), jnp.float32, -k, k)

    return {
        # bf16 weights: MXU-native path, half the VMEM residency; f32 accumulation.
        "w_ih": jnp.stack(w_ih_layers, 0).astype(jnp.bfloat16),          # [L, D, 4H]
        "w_hh": jnp.stack(w_hh_layers, 0).astype(jnp.bfloat16),          # [L, H, 4H]
        "b_gates": jnp.stack(b_layers, 0),                               # [L, 1, 4H] f32
        "w_lin_t": jnp.pad(w_lin.T, ((0, 0), (0, out_pad - input_size))
                           ).astype(jnp.bfloat16),                       # [H, out_pad]
        "b_lin": jnp.pad(b_lin.reshape(1, -1),
                         ((0, 0), (0, out_pad - input_size))),           # [1, out_pad] f32
    }


# ------------------------------ host wrappers -------------------------------- #

def decoder_decode(params, input_seq, h, c, *, num_layers, hidden_size, input_size,
                   num_steps):
    """Run `num_steps` autoregressive Decoder.forward steps in ONE pallas_call.

    input_seq: [B, input_size]; h, c: [num_layers, B, hidden].
    Returns (preds [num_steps, B, input_size], h_T, c_T).
    """
    B = input_seq.shape[0]
    Bp = max(8, ((B + 7) // 8) * 8)               # sublane-aligned batch
    L, H = num_layers, hidden_size
    D = params["w_ih"].shape[1]
    out_pad = params["w_lin_t"].shape[1]

    # NOTE: in a real serving loop keep x/h/c persistently in this padded layout so
    # these pads and the output slices are not re-materialized around every call.
    x_p = jnp.pad(input_seq, ((0, Bp - B), (0, D - input_seq.shape[1])))
    h_p = jnp.pad(h, ((0, 0), (0, Bp - B), (0, 0)))
    c_p = jnp.pad(c, ((0, 0), (0, Bp - B), (0, 0)))

    vmem = pl.BlockSpec(memory_space=pltpu.MemorySpace.VMEM)
    kernel = functools.partial(_decoder_decode_kernel, num_layers=L, hidden_size=H,
                               input_size=input_size, num_steps=num_steps)

    # Weights + state here are a few tens of KiB, far below even v7x's 64 MiB VMEM;
    # at larger H/L, budget resident weights against 64 MiB (v7x) and stream W per
    # layer with pl.Buffered(2) instead of keeping all layers resident.
    preds_p, h_new, c_new = pl.pallas_call(
        kernel,
        out_shape=(jax.ShapeDtypeStruct((num_steps, Bp, out_pad), jnp.float32),
                   jax.ShapeDtypeStruct((L, Bp, H), jnp.float32),
                   jax.ShapeDtypeStruct((L, Bp, H), jnp.float32)),
        in_specs=[vmem] * 8,
        out_specs=(vmem, vmem, vmem),
        # h/c state updated in place at the HBM level.
        input_output_aliases={1: 1, 2: 2},
    )(x_p, h_p, c_p, params["w_ih"], params["w_hh"], params["b_gates"],
      params["w_lin_t"], params["b_lin"])

    return (preds_p[:, :B, :input_size], h_new[:, :B, :], c_new[:, :B, :])


def decoder_forward(params, input_seq, h, c, *, num_layers, hidden_size, input_size):
    """One Decoder.forward step (matches the PyTorch module): returns (pred, h, c)."""
    preds, h1, c1 = decoder_decode(params, input_seq, h, c, num_layers=num_layers,
                                   hidden_size=hidden_size, input_size=input_size,
                                   num_steps=1)
    return preds[0], h1, c1


# ---------------------------- pure-JAX reference ----------------------------- #

def decoder_step_reference(params, x, h, c, *, num_layers, hidden_size, input_size):
    H = hidden_size
    layer_in = x
    h_new, c_new = [], []
    for l in range(num_layers):
        in_dim = input_size if l == 0 else H
        gates = (jnp.dot(layer_in.astype(jnp.bfloat16), params["w_ih"][l, :in_dim],
                         preferred_element_type=jnp.float32)
                 + jnp.dot(h[l].astype(jnp.bfloat16), params["w_hh"][l],
                           preferred_element_type=jnp.float32)
                 + params["b_gates"][l])
        i = jax.nn.sigmoid(gates[:, 0 * H:1 * H])
        f = jax.nn.sigmoid(gates[:, 1 * H:2 * H])
        g = jnp.tanh(gates[:, 2 * H:3 * H])
        o = jax.nn.sigmoid(gates[:, 3 * H:4 * H])
        cl = f * c[l] + i * g
        hl = o * jnp.tanh(cl)
        h_new.append(hl)
        c_new.append(cl)
        layer_in = hl
    pred = (jnp.dot(layer_in.astype(jnp.bfloat16), params["w_lin_t"][:, :input_size],
                    preferred_element_type=jnp.float32)
            + params["b_lin"][:, :input_size])
    return pred, jnp.stack(h_new, 0), jnp.stack(c_new, 0)


def decoder_decode_reference(params, x, h, c, num_steps, **kw):
    preds = []
    for _ in range(num_steps):
        x, h, c = decoder_step_reference(params, x, h, c, **kw)
        preds.append(x)
    return jnp.stack(preds, 0), h, c


# ----------------------------------- main ------------------------------------ #

if __name__ == "__main__":
    input_size = 16
    hidden_size = 32
    num_layers = 2
    output_size = 16   # unused by forward (matches the PyTorch module)
    batch_size = 2
    num_steps = 8      # fused autoregressive decode length for the demo

    key = jax.random.PRNGKey(0)
    kp, kx, kh, kc = jax.random.split(key, 4)

    params = init_decoder_params(kp, input_size, hidden_size, num_layers)
    x = jax.random.normal(kx, (batch_size, input_size), jnp.float32)
    h0 = jax.random.normal(kh, (num_layers, batch_size, hidden_size), jnp.float32)
    c0 = jax.random.normal(kc, (num_layers, batch_size, hidden_size), jnp.float32)

    common = dict(num_layers=num_layers, hidden_size=hidden_size, input_size=input_size)

    # --- single forward step (exact module semantics) ---
    fwd = jax.jit(functools.partial(decoder_forward, **common))
    pred, h1, c1 = fwd(params, x, h0, c0)
    jax.block_until_ready((pred, h1, c1))

    pred_r, h_r, c_r = decoder_step_reference(params, x, h0, c0, **common)
    assert pred.shape == (batch_size, input_size)
    assert h1.shape == (num_layers, batch_size, hidden_size)
    assert c1.shape == (num_layers, batch_size, hidden_size)
    assert jnp.allclose(pred, pred_r, atol=2e-3, rtol=2e-3)
    assert jnp.allclose(h1, h_r, atol=2e-3, rtol=2e-3)
    assert jnp.allclose(c1, c_r, atol=2e-3, rtol=2e-3)

    # --- fused T-step autoregressive decode (time loop hoisted into the kernel) ---
    dec = jax.jit(functools.partial(decoder_decode, num_steps=num_steps, **common))
    preds, hT, cT = dec(params, x, h0, c0)
    jax.block_until_ready((preds, hT, cT))

    preds_r, hT_r, cT_r = decoder_decode_reference(params, x, h0, c0, num_steps, **common)
    assert preds.shape == (num_steps, batch_size, input_size)
    assert jnp.allclose(preds, preds_r, atol=5e-3, rtol=5e-3)
    assert jnp.allclose(hT, hT_r, atol=5e-3, rtol=5e-3)
    assert jnp.allclose(cT, cT_r, atol=5e-3, rtol=5e-3)

    print("KERNEL_OK")
</pallas_src>

<mosaic_0001>
module attributes {stable_mosaic.version = 11 : i64} {
  func.func @_decoder_decode_kernel(%arg0: memref<8x32xf32, #tpu.memory_space<vmem>>, %arg1: memref<2x8x32xf32, #tpu.memory_space<vmem>>, %arg2: memref<2x8x32xf32, #tpu.memory_space<vmem>>, %arg3: memref<2x32x128xbf16, #tpu.memory_space<vmem>>, %arg4: memref<2x32x128xbf16, #tpu.memory_space<vmem>>, %arg5: memref<2x1x128xf32, #tpu.memory_space<vmem>>, %arg6: memref<32x128xbf16, #tpu.memory_space<vmem>>, %arg7: memref<1x128xf32, #tpu.memory_space<vmem>>, %arg8: memref<1x8x128xf32, #tpu.memory_space<vmem>>, %arg9: memref<2x8x32xf32, #tpu.memory_space<vmem>>, %arg10: memref<2x8x32xf32, #tpu.memory_space<vmem>>) attributes {dimension_semantics = [], scalar_prefetch = 0 : i64, scratch_operands = 0 : i64, tpu.core_type = #tpu.core_type<tc>} {
    %c0 = arith.constant 0 : index
    %c0_0 = arith.constant 0 : index
    %c0_1 = arith.constant 0 : index
    %0 = vector.load %arg3[%c0, %c0_0, %c0_1] : memref<2x32x128xbf16, #tpu.memory_space<vmem>>, vector<1x32x128xbf16>
    %1 = vector.shape_cast %0 : vector<1x32x128xbf16> to vector<32x128xbf16>
    %c1 = arith.constant 1 : index
    %c0_2 = arith.constant 0 : index
    %c0_3 = arith.constant 0 : index
    %2 = vector.load %arg3[%c1, %c0_2, %c0_3] : memref<2x32x128xbf16, #tpu.memory_space<vmem>>, vector<1x32x128xbf16>
    %3 = vector.shape_cast %2 : vector<1x32x128xbf16> to vector<32x128xbf16>
    %c0_4 = arith.constant 0 : index
    %c0_5 = arith.constant 0 : index
    %c0_6 = arith.constant 0 : index
    %4 = vector.load %arg4[%c0_4, %c0_5, %c0_6] : memref<2x32x128xbf16, #tpu.memory_space<vmem>>, vector<1x32x128xbf16>
    %5 = vector.shape_cast %4 : vector<1x32x128xbf16> to vector<32x128xbf16>
    %c1_7 = arith.constant 1 : index
    %c0_8 = arith.constant 0 : index
    %c0_9 = arith.constant 0 : index
    %6 = vector.load %arg4[%c1_7, %c0_8, %c0_9] : memref<2x32x128xbf16, #tpu.memory_space<vmem>>, vector<1x32x128xbf16>
    %7 = vector.shape_cast %6 : vector<1x32x128xbf16> to vector<32x128xbf16>
    %c0_10 = arith.constant 0 : index
    %c0_11 = arith.constant 0 : index
    %c0_12 = arith.constant 0 : index
    %8 = vector.load %arg5[%c0_10, %c0_11, %c0_12] : memref<2x1x128xf32, #tpu.memory_space<vmem>>, vector<1x1x128xf32>
    %9 = vector.shape_cast %8 : vector<1x1x128xf32> to vector<1x128xf32>
    %c1_13 = arith.constant 1 : index
    %c0_14 = arith.constant 0 : index
    %c0_15 = arith.constant 0 : index
    %10 = vector.load %arg5[%c1_13, %c0_14, %c0_15] : memref<2x1x128xf32, #tpu.memory_space<vmem>>, vector<1x1x128xf32>
    %11 = vector.shape_cast %10 : vector<1x1x128xf32> to vector<1x128xf32>
    %c0_16 = arith.constant 0 : index
    %c0_17 = arith.constant 0 : index
    %12 = vector.load %arg6[%c0_16, %c0_17] : memref<32x128xbf16, #tpu.memory_space<vmem>>, vector<32x128xbf16>
    %c0_18 = arith.constant 0 : index
    %c0_19 = arith.constant 0 : index
    %13 = vector.load %arg7[%c0_18, %c0_19] : memref<1x128xf32, #tpu.memory_space<vmem>>, vector<1x128xf32>
    %c0_20 = arith.constant 0 : index
    %c0_21 = arith.constant 0 : index
    %c0_22 = arith.constant 0 : index
    %14 = vector.load %arg1[%c0_20, %c0_21, %c0_22] : memref<2x8x32xf32, #tpu.memory_space<vmem>>, vector<1x8x32xf32>
    %15 = vector.shape_cast %14 : vector<1x8x32xf32> to vector<8x32xf32>
    %c1_23 = arith.constant 1 : index
    %c0_24 = arith.constant 0 : index
    %c0_25 = arith.constant 0 : index
    %16 = vector.load %arg1[%c1_23, %c0_24, %c0_25] : memref<2x8x32xf32, #tpu.memory_space<vmem>>, vector<1x8x32xf32>
    %17 = vector.shape_cast %16 : vector<1x8x32xf32> to vector<8x32xf32>
    %c0_26 = arith.constant 0 : index
    %c0_27 = arith.constant 0 : index
    %c0_28 = arith.constant 0 : index
    %18 = vector.load %arg2[%c0_26, %c0_27, %c0_28] : memref<2x8x32xf32, #tpu.memory_space<vmem>>, vector<1x8x32xf32>
    %19 = vector.shape_cast %18 : vector<1x8x32xf32> to vector<8x32xf32>
    %c1_29 = arith.constant 1 : index
    %c0_30 = arith.constant 0 : index
    %c0_31 = arith.constant 0 : index
    %20 = vector.load %arg2[%c1_29, %c0_30, %c0_31] : memref<2x8x32xf32, #tpu.memory_space<vmem>>, vector<1x8x32xf32>
    %21 = vector.shape_cast %20 : vector<1x8x32xf32> to vector<8x32xf32>
    %c0_32 = arith.constant 0 : index
    %c0_33 = arith.constant 0 : index
    %22 = vector.load %arg0[%c0_32, %c0_33] : memref<8x32xf32, #tpu.memory_space<vmem>>, vector<8x32xf32>
    %23 = arith.truncf %22 : vector<8x32xf32> to vector<8x32xbf16>
    %cst = arith.constant dense<0.000000e+00> : vector<8x128xf32>
    %24 = tpu.matmul %23, %1, %cst {dimension_numbers = #tpu.dot_dimension_numbers<[1], [0], [0], [1], [0, 0, 1, 1], [], []>} : vector<8x32xbf16>, vector<32x128xbf16>, vector<8x128xf32> -> vector<8x128xf32>
    %25 = arith.truncf %15 : vector<8x32xf32> to vector<8x32xbf16>
    %cst_34 = arith.constant dense<0.000000e+00> : vector<8x128xf32>
    %26 = tpu.matmul %25, %5, %cst_34 {dimension_numbers = #tpu.dot_dimension_numbers<[1], [0], [0], [1], [0, 0, 1, 1], [], []>} : vector<8x32xbf16>, vector<32x128xbf16>, vector<8x128xf32> -> vector<8x128xf32>
    %27 = arith.addf %24, %26 : vector<8x128xf32>
    %28 = vector.broadcast %9 : vector<1x128xf32> to vector<8x128xf32>
    %29 = arith.addf %27, %28 : vector<8x128xf32>
    %30 = arith.negf %29 : vector<8x128xf32>
    %31 = math.exp %30 : vector<8x128xf32>
    %cst_35 = arith.constant 1.000000e+00 : f32
    %32 = vector.broadcast %cst_35 : f32 to vector<8x128xf32>
    %33 = arith.addf %32, %31 : vector<8x128xf32>
    %34 = arith.divf %32, %33 : vector<8x128xf32>
    %35 = math.tanh %29 : vector<8x128xf32>
    %36 = vector.extract_strided_slice %34 {offsets = [0, 0], sizes = [8, 32], strides = [1, 1]} : vector<8x128xf32> to vector<8x32xf32>
    %37 = vector.extract_strided_slice %34 {offsets = [0, 32], sizes = [8, 32], strides = [1, 1]} : vector<8x128xf32> to vector<8x32xf32>
    %38 = vector.extract_strided_slice %35 {offsets = [0, 64], sizes = [8, 32], strides = [1, 1]} : vector<8x128xf32> to vector<8x32xf32>
    %39 = vector.extract_strided_slice %34 {offsets = [0, 96], sizes = [8, 32], strides = [1, 1]} : vector<8x128xf32> to vector<8x32xf32>
    %40 = arith.mulf %37, %19 : vector<8x32xf32>
    %41 = arith.mulf %36, %38 : vector<8x32xf32>
    %42 = arith.addf %40, %41 : vector<8x32xf32>
    %43 = math.tanh %42 : vector<8x32xf32>
    %44 = arith.mulf %39, %43 : vector<8x32xf32>
    %45 = arith.truncf %44 : vector<8x32xf32> to vector<8x32xbf16>
    %cst_36 = arith.constant dense<0.000000e+00> : vector<8x128xf32>
    %46 = tpu.matmul %45, %3, %cst_36 {dimension_numbers = #tpu.dot_dimension_numbers<[1], [0], [0], [1], [0, 0, 1, 1], [], []>} : vector<8x32xbf16>, vector<32x128xbf16>, vector<8x128xf32> -> vector<8x128xf32>
    %47 = arith.truncf %17 : vector<8x32xf32> to vector<8x32xbf16>
    %cst_37 = arith.constant dense<0.000000e+00> : vector<8x128xf32>
    %48 = tpu.matmul %47, %7, %cst_37 {dimension_numbers = #tpu.dot_dimension_numbers<[1], [0], [0], [1], [0, 0, 1, 1], [], []>} : vector<8x32xbf16>, vector<32x128xbf16>, vector<8x128xf32> -> vector<8x128xf32>
    %49 = arith.addf %46, %48 : vector<8x128xf32>
    %50 = vector.broadcast %11 : vector<1x128xf32> to vector<8x128xf32>
    %51 = arith.addf %49, %50 : vector<8x128xf32>
    %52 = arith.negf %51 : vector<8x128xf32>
    %53 = math.exp %52 : vector<8x128xf32>
    %cst_38 = arith.constant 1.000000e+00 : f32
    %54 = vector.broadcast %cst_38 : f32 to vector<8x128xf32>
    %55 = arith.addf %54, %53 : vector<8x128xf32>
    %56 = arith.divf %54, %55 : vector<8x128xf32>
    %57 = math.tanh %51 : vector<8x128xf32>
    %58 = vector.extract_strided_slice %56 {offsets = [0, 0], sizes = [8, 32], strides = [1, 1]} : vector<8x128xf32> to vector<8x32xf32>
    %59 = vector.extract_strided_slice %56 {offsets = [0, 32], sizes = [8, 32], strides = [1, 1]} : vector<8x128xf32> to vector<8x32xf32>
    %60 = vector.extract_strided_slice %57 {offsets = [0, 64], sizes = [8, 32], strides = [1, 1]} : vector<8x128xf32> to vector<8x32xf32>
    %61 = vector.extract_strided_slice %56 {offsets = [0, 96], sizes = [8, 32], strides = [1, 1]} : vector<8x128xf32> to vector<8x32xf32>
    %62 = arith.mulf %59, %21 : vector<8x32xf32>
    %63 = arith.mulf %58, %60 : vector<8x32xf32>
    %64 = arith.addf %62, %63 : vector<8x32xf32>
    %65 = math.tanh %64 : vector<8x32xf32>
    %66 = arith.mulf %61, %65 : vector<8x32xf32>
    %67 = arith.truncf %66 : vector<8x32xf32> to vector<8x32xbf16>
    %cst_39 = arith.constant dense<0.000000e+00> : vector<8x128xf32>
    %68 = tpu.matmul %67, %12, %cst_39 {dimension_numbers = #tpu.dot_dimension_numbers<[1], [0], [0], [1], [0, 0, 1, 1], [], []>} : vector<8x32xbf16>, vector<32x128xbf16>, vector<8x128xf32> -> vector<8x128xf32>
    %69 = vector.broadcast %13 : vector<1x128xf32> to vector<8x128xf32>
    %70 = arith.addf %68, %69 : vector<8x128xf32>
    %c0_40 = arith.constant 0 : index
    %c0_41 = arith.constant 0 : index
    %c0_42 = arith.constant 0 : index
    %71 = vector.load %arg8[%c0_40, %c0_41, %c0_42] : memref<1x8x128xf32, #tpu.memory_space<vmem>>, vector<1x8x128xf32>
    %72 = vector.shape_cast %71 : vector<1x8x128xf32> to vector<8x128xf32>
    %73 = vector.shape_cast %70 : vector<8x128xf32> to vector<1x8x128xf32>
    tpu.vector_store %arg8[%c0_40, %c0_41, %c0_42], %73 {strides = array<i32>} : memref<1x8x128xf32, #tpu.memory_space<vmem>>, vector<1x8x128xf32>,
    %c0_43 = arith.constant 0 : index
    %c0_44 = arith.constant 0 : index
    %c0_45 = arith.constant 0 : index
    %74 = vector.load %arg9[%c0_43, %c0_44, %c0_45] : memref<2x8x32xf32, #tpu.memory_space<vmem>>, vector<1x8x32xf32>
    %75 = vector.shape_cast %74 : vector<1x8x32xf32> to vector<8x32xf32>
    %76 = vector.shape_cast %44 : vector<8x32xf32> to vector<1x8x32xf32>
    tpu.vector_store %arg9[%c0_43, %c0_44, %c0_45], %76 {strides = array<i32>} : memref<2x8x32xf32, #tpu.memory_space<vmem>>, vector<1x8x32xf32>,
    %c0_46 = arith.constant 0 : index
    %c0_47 = arith.constant 0 : index
    %c0_48 = arith.constant 0 : index
    %77 = vector.load %arg10[%c0_46, %c0_47, %c0_48] : memref<2x8x32xf32, #tpu.memory_space<vmem>>, vector<1x8x32xf32>
    %78 = vector.shape_cast %77 : vector<1x8x32xf32> to vector<8x32xf32>
    %79 = vector.shape_cast %42 : vector<8x32xf32> to vector<1x8x32xf32>
    tpu.vector_store %arg10[%c0_46, %c0_47, %c0_48], %79 {strides = array<i32>} : memref<2x8x32xf32, #tpu.memory_space<vmem>>, vector<1x8x32xf32>,
    %c1_49 = arith.constant 1 : index
    %c0_50 = arith.constant 0 : index
    %c0_51 = arith.constant 0 : index
    %80 = vector.load %arg9[%c1_49, %c0_50, %c0_51] : memref<2x8x32xf32, #tpu.memory_space<vmem>>, vector<1x8x32xf32>
    %81 = vector.shape_cast %80 : vector<1x8x32xf32> to vector<8x32xf32>
    %82 = vector.shape_cast %66 : vector<8x32xf32> to vector<1x8x32xf32>
    tpu.vector_store %arg9[%c1_49, %c0_50, %c0_51], %82 {strides = array<i32>} : memref<2x8x32xf32, #tpu.memory_space<vmem>>, vector<1x8x32xf32>,
    %c1_52 = arith.constant 1 : index
    %c0_53 = arith.constant 0 : index
    %c0_54 = arith.constant 0 : index
    %83 = vector.load %arg10[%c1_52, %c0_53, %c0_54] : memref<2x8x32xf32, #tpu.memory_space<vmem>>, vector<1x8x32xf32>
    %84 = vector.shape_cast %83 : vector<1x8x32xf32> to vector<8x32xf32>
    %85 = vector.shape_cast %64 : vector<8x32xf32> to vector<1x8x32xf32>
    tpu.vector_store %arg10[%c1_52, %c0_53, %c0_54], %85 {strides = array<i32>} : memref<2x8x32xf32, #tpu.memory_space<vmem>>, vector<1x8x32xf32>,
    return
  }
}

</mosaic_0001>

<llo_original>
// kernel: decoder_forward.1
$region0: #{decoder_forward.1}
  #allocation0 [shape = 'u32[]', space=smem, size = 0x4, offset = 0x4, fixed_abs, tag = 'smem constant byte address 0x4 - core index']
  #allocation1 [shape = 'u32[144,128]{1,0:T(1,128)}', space=vmem, size = 0x12000, scoped, tag = 'internal scratch']
  %s0 = inlined_call_operand.vmem [shape: f32[8,32], index: 0, kind: input, shape index: {}]
  %s1 = inlined_call_operand.vmem [shape: f32[2,8,32], index: 1, kind: input, shape index: {}, may-alias: {1,9}]
  %s2 = inlined_call_operand.vmem [shape: f32[2,8,32], index: 2, kind: input, shape index: {}, may-alias: {2,10}]
  %s3 = inlined_call_operand.vmem [shape: bf16[2,32,128], index: 3, kind: input, shape index: {}]
  %s4 = inlined_call_operand.vmem [shape: bf16[2,32,128], index: 4, kind: input, shape index: {}]
  %s5 = inlined_call_operand.hbm [shape: f32[2,1,128], index: 5, kind: input, shape index: {}]
  %s6 = inlined_call_operand.hbm [shape: bf16[32,128], index: 6, kind: input, shape index: {}]
  %s7 = inlined_call_operand.hbm [shape: f32[1,128], index: 7, kind: input, shape index: {}]
  %s8 = inlined_call_operand.vmem [shape: f32[1,8,128], index: 8, kind: output, shape index: {0}]
  %s9 = inlined_call_operand.vmem [shape: f32[2,8,32], index: 9, kind: output, shape index: {1}, may-alias: {1,9}]
  %s10 = inlined_call_operand.vmem [shape: f32[2,8,32], index: 10, kind: output, shape index: {2}, may-alias: {2,10}]
  %11 = xla_tuple %s8, %s9, %s10
  %s12 = sld [smem:[#allocation0]]
  $region70: #{decoder_forward.1} parent=0
    _
  %s14 = ssub.s32 1, %s12
  %s15 = scalar_select 0, %s14, %s12
  $region1: #{decoder_forward.1} parent=0
    #allocation2 [shape = 'u8[1024]{0}', space=vmem, size = 0x400, scoped, tag = 'input window, operand 5, single buffered']
    #allocation3 [shape = 's32[1]{0}', space=sflag, size = 0x4, scoped, tag = 'scoped memory for decoder_forward.1']
    #allocation4 [shape = 'u8[8192]{0}', space=vmem, size = 0x2000, scoped, tag = 'input window, operand 6, single buffered']
    #allocation5 [shape = 's32[1]{0}', space=sflag, size = 0x4, scoped, tag = 'scoped memory for decoder_forward.1']
    #allocation6 [shape = 'u8[512]{0}', space=vmem, size = 0x400, scoped, tag = 'input window, operand 7, single buffered']
    %16 = vsyncpa [#allocation3], 0
    %17 = vsyncpa [#allocation5], 0
    // Predicated region
    $region2: #{decoder_forward.1} parent=1 // pred_check
      _
    $region3: #{decoder_forward.1} parent=1 // pred_check_branch
      %19 = sbr.rel (0) target = $region5
    $region4: #{decoder_forward.1} parent=1 // pred_region
      _
    $region5: #{decoder_forward.1} parent=1 // pred_fallthru
      _
    // Predicated region
    $region6: #{decoder_forward.1} parent=1 // pred_check
      _
    $region7: #{decoder_forward.1} parent=1 // pred_check_branch
      %21 = sbr.rel (0) target = $region9
    $region8: #{decoder_forward.1} parent=1 // pred_region
      _
    $region9: #{decoder_forward.1} parent=1 // pred_fallthru
      _
    // Predicated region
    $region10: #{decoder_forward.1} parent=1 // pred_check
      _
    $region11: #{decoder_forward.1} parent=1 // pred_check_branch
      %23 = sbr.rel (0) target = $region13
    $region12: #{decoder_forward.1} parent=1 // pred_region
      _
    $region13: #{decoder_forward.1} parent=1 // pred_fallthru
      _
    // Predicated region
    $region14: #{decoder_forward.1} parent=1 // pred_check
      _
    $region15: #{decoder_forward.1} parent=1 // pred_check_branch
      %25 = sbr.rel (0) target = $region17
    $region16: #{decoder_forward.1} parent=1 // pred_region
      _
    $region17: #{decoder_forward.1} parent=1 // pred_fallthru
      _
    // Predicated region
    $region18: #{decoder_forward.1} parent=1 // pred_check
      _
    $region19: #{decoder_forward.1} parent=1 // pred_check_branch
      %27 = sbr.rel (0) target = $region21
    $region20: #{decoder_forward.1} parent=1 // pred_region
      _
    $region21: #{decoder_forward.1} parent=1 // pred_fallthru
      _
    // Predicated region
    $region22: #{decoder_forward.1} parent=1 // pred_check
      _
    $region23: #{decoder_forward.1} parent=1 // pred_check_branch
      %29 = sbr.rel (0) target = $region25
    $region24: #{decoder_forward.1} parent=1 // pred_region
      %s31 = ssub.s32 32, 32
      %32 = vsyncadd [#allocation3], %s31
      %s33 = sshll.u32 [#allocation2], 4
      %s34 = int_to_ptr.vmem [resolvable:$true] %s33
      %39 = dma.hbm_to_vmem [thread:$0]  %s5, 32, %s34, [#allocation3], 16, 16, 1
    $region25: #{decoder_forward.1} parent=1 // pred_fallthru
      _
    // Predicated region
    $region26: #{decoder_forward.1} parent=1 // pred_check
      _
    $region27: #{decoder_forward.1} parent=1 // pred_check_branch
      %41 = sbr.rel (0) target = $region29
    $region28: #{decoder_forward.1} parent=1 // pred_region
      %s43 = ssub.s32 256, 256
      %44 = vsyncadd [#allocation5], %s43
      %s45 = sshll.u32 [#allocation4], 4
      %s46 = int_to_ptr.vmem [resolvable:$true] %s45
      %51 = dma.hbm_to_vmem [thread:$0]  %s6, 256, %s46, [#allocation5], 64, 64, 4
    $region29: #{decoder_forward.1} parent=1 // pred_fallthru
      _
    // Predicated region
    $region30: #{decoder_forward.1} parent=1 // pred_check
      _
    $region31: #{decoder_forward.1} parent=1 // pred_check_branch
      %53 = sbr.rel (0) target = $region33
    $region32: #{decoder_forward.1} parent=1 // pred_region
      %s55 = ssub.s32 16, 16
      %56 = vsyncadd [#allocation5], %s55
      %s58 = sshll.u32 [#allocation6], 4
      %s59 = int_to_ptr.vmem [resolvable:$true] %s58
      %61 = dma.hbm_to_vmem [thread:$0]  %s7, 16, %s59, [#allocation5]
    $region33: #{decoder_forward.1} parent=1 // pred_fallthru
      _
    // Predicated region
    $region34: #{decoder_forward.1} parent=1 // pred_check
      _
    $region35: #{decoder_forward.1} parent=1 // pred_check_branch
      %63 = sbr.rel (0) target = $region37
    $region36: #{decoder_forward.1} parent=1 // pred_region
      %64 = dma.done [#allocation3], 32
    $region37: #{decoder_forward.1} parent=1 // pred_fallthru
      _
    // Predicated region
    $region38: #{decoder_forward.1} parent=1 // pred_check
      _
    $region39: #{decoder_forward.1} parent=1 // pred_check_branch
      %66 = sbr.rel (0) target = $region41
    $region40: #{decoder_forward.1} parent=1 // pred_region
      %67 = dma.done [#allocation5], 256
    $region41: #{decoder_forward.1} parent=1 // pred_fallthru
      _
    // Predicated region
    $region42: #{decoder_forward.1} parent=1 // pred_check
      _
    $region43: #{decoder_forward.1} parent=1 // pred_check_branch
      %69 = sbr.rel (0) target = $region45
    $region44: #{decoder_forward.1} parent=1 // pred_region
      %70 = dma.done [#allocation5], 16
    $region45: #{decoder_forward.1} parent=1 // pred_fallthru
      _
    %v72 = vld [vmem:[%s3] sm:$0xf]
    %v73 = vld [vmem:[%s3 + $0x4] sm:$0xf]
    %v74 = vld [vmem:[%s3 + $0x8] sm:$0xf]
    %v75 = vld [vmem:[%s3 + $0xc] sm:$0xf]
    %s76 = scalar_lea.vmem %s3, 16
    %v77 = vld [vmem:[%s76] sm:$0xf]
    %v78 = vld [vmem:[%s76 + $0x4] sm:$0xf]
    %v79 = vld [vmem:[%s76 + $0x8] sm:$0xf]
    %v80 = vld [vmem:[%s76 + $0xc] sm:$0xf]
    %v81 = vld [vmem:[%s4] sm:$0xf]
    %v82 = vld [vmem:[%s4 + $0x4] sm:$0xf]
    %v83 = vld [vmem:[%s4 + $0x8] sm:$0xf]
    %v84 = vld [vmem:[%s4 + $0xc] sm:$0xf]
    %s85 = scalar_lea.vmem %s4, 16
    %v86 = vld [vmem:[%s85] sm:$0xf]
    %v87 = vld [vmem:[%s85 + $0x4] sm:$0xf]
    %v88 = vld [vmem:[%s85 + $0x8] sm:$0xf]
    %v89 = vld [vmem:[%s85 + $0xc] sm:$0xf]
    %v90 = vld [vmem:[#allocation2] sm:$0x1]
    %s91 = scalar_lea.vmem [#allocation2], 1
    %v92 = vld [vmem:[%s91] sm:$0x1]
    %v93 = vld [vmem:[#allocation4] sm:$0xf]
    %v94 = vld [vmem:[#allocation4 + $0x4] sm:$0xf]
    %v95 = vld [vmem:[#allocation4 + $0x8] sm:$0xf]
    %v96 = vld [vmem:[#allocation4 + $0xc] sm:$0xf]
    %v97 = vld [vmem:[#allocation6] sm:$0x1]
    %v98 = vld [vmem:[%s1] sm:$0xff]
    %s99 = scalar_lea.vmem %s1, 8
    %v100 = vld [vmem:[%s99] sm:$0xff]
    %v101 = vld [vmem:[%s2] sm:$0xff]
    %s102 = scalar_lea.vmem %s2, 8
    %v103 = vld [vmem:[%s102] sm:$0xff]
    %v104 = vld [vmem:[%s0] sm:$0xff]
    %v105 = vpack.c.bf16 %v104, %v104
    %v106 = vpack.c.bf16 %v98, %v98
    %v111 = vunpack.c.l.b16 %v81
    %v112 = vunpack.c.l.b16 %v82
    %v113 = vunpack.c.l.b16 %v83
    %v114 = vunpack.c.l.b16 %v84
    %v115 = vpack.c.b16 %v112, %v111
    %v116 = vpack.c.b16 %v114, %v113
    %vm119 = vcmask 261120
    %v121 = vsel %vm119, %v106, 0
    %123 = vmatprep.subr.bf16.mxu0 0
    %124 = vmatpush1.bf16.msra.mxu0 %v115
    %125 = vmatprep.subr.bf16.mxu0 0
    %126 = vmatpush1.bf16.msra.mxu0 %v116
    %127 = vmatprep.subr.bf16.mxu0 0
    %128 = vmatpush1.bf16.msra.mxu0 0
    %129 = vmatprep.subr.bf16.mxu0 0
    %130 = vmatpush1.bf16.msra.mxu0 0
    %131 = vmatprep.subr.bf16.mxu0 0
    %132 = vmatpush1.bf16.msra.mxu0 0
    %133 = vmatprep.subr.bf16.mxu0 0
    %134 = vmatpush1.bf16.msra.mxu0 0
    %135 = vmatprep.subr.bf16.mxu0 0
    %136 = vmatpush1.bf16.msra.mxu0 0
    %137 = vmatprep.subr.bf16.mxu0 0
    %138 = vmatpush1.bf16.msra.mxu0 0
    %139 = vmatprep.subr.bf16.mxu0 0
    %140 = vmatpush1.bf16.msra.mxu0 0
    %141 = vmatprep.subr.bf16.mxu0 0
    %142 = vmatpush1.bf16.msra.mxu0 0
    %143 = vmatprep.subr.bf16.mxu0 0
    %144 = vmatpush1.bf16.msra.mxu0 0
    %145 = vmatprep.subr.bf16.mxu0 0
    %146 = vmatpush1.bf16.msra.mxu0 0
    %147 = vmatprep.subr.bf16.mxu0 0
    %148 = vmatpush1.bf16.msra.mxu0 0
    %149 = vmatprep.subr.bf16.mxu0 0
    %150 = vmatpush1.bf16.msra.mxu0 0
    %151 = vmatprep.subr.bf16.mxu0 0
    %152 = vmatpush1.bf16.msra.mxu0 0
    %153 = vmatprep.subr.bf16.mxu0 0
    %154 = vmatpush1.bf16.msra.mxu0 0
    %155 = vmatprep.mubr.bf16.mxu0 0
    %156 = vmatmul.mubr.bf16.gmra.mrb[0].mxu0 %v121
    %v157 = vpop.f32.mrb[0].mxu0
    %v158 = vadd.f32 0.0, %v157
    %v159 = vpop.f32.mrb[0].mxu0
    %v160 = vpop.f32.mrb[0].mxu0
    %v161 = vpop.f32.mrb[0].mxu0
    %162 = vdwg.mxu0
    %v167 = vunpack.c.l.b16 %v72
    %v168 = vunpack.c.l.b16 %v73
    %v169 = vunpack.c.l.b16 %v74
    %v170 = vunpack.c.l.b16 %v75
    %v171 = vpack.c.b16 %v168, %v167
    %v172 = vpack.c.b16 %v170, %v169
    %v176 = vsel %vm119, %v105, 0
    %178 = vmatprep.subr.bf16.mxu0 0
    %179 = vmatpush1.bf16.msra.mxu0 %v171
    %180 = vmatprep.subr.bf16.mxu0 0
    %181 = vmatpush1.bf16.msra.mxu0 %v172
    %182 = vmatprep.subr.bf16.mxu0 0
    %183 = vmatpush1.bf16.msra.mxu0 0
    %184 = vmatprep.subr.bf16.mxu0 0
    %185 = vmatpush1.bf16.msra.mxu0 0
    %186 = vmatprep.subr.bf16.mxu0 0
    %187 = vmatpush1.bf16.msra.mxu0 0
    %188 = vmatprep.subr.bf16.mxu0 0
    %189 = vmatpush1.bf16.msra.mxu0 0
    %190 = vmatprep.subr.bf16.mxu0 0
    %191 = vmatpush1.bf16.msra.mxu0 0
    %192 = vmatprep.subr.bf16.mxu0 0
    %193 = vmatpush1.bf16.msra.mxu0 0
    %194 = vmatprep.subr.bf16.mxu0 0
    %195 = vmatpush1.bf16.msra.mxu0 0
    %196 = vmatprep.subr.bf16.mxu0 0
    %197 = vmatpush1.bf16.msra.mxu0 0
    %198 = vmatprep.subr.bf16.mxu0 0
    %199 = vmatpush1.bf16.msra.mxu0 0
    %200 = vmatprep.subr.bf16.mxu0 0
    %201 = vmatpush1.bf16.msra.mxu0 0
    %202 = vmatprep.subr.bf16.mxu0 0
    %203 = vmatpush1.bf16.msra.mxu0 0
    %204 = vmatprep.subr.bf16.mxu0 0
    %205 = vmatpush1.bf16.msra.mxu0 0
    %206 = vmatprep.subr.bf16.mxu0 0
    %207 = vmatpush1.bf16.msra.mxu0 0
    %208 = vmatprep.subr.bf16.mxu0 0
    %209 = vmatpush1.bf16.msra.mxu0 0
    %210 = vmatprep.mubr.bf16.mxu0 0
    %211 = vmatmul.mubr.bf16.gmra.mrb[0].mxu0 %v176
    %v212 = vpop.f32.mrb[0].mxu0
    %v213 = vadd.f32 %v158, %v212
    %v214 = vpop.f32.mrb[0].mxu0
    %v215 = vpop.f32.mrb[0].mxu0
    %v216 = vpop.f32.mrb[0].mxu0
    %217 = vdwg.mxu0
    %v219 = vlaneseq
    %v220 = vshrl.u32 %v219, 7
    %v221 = vsub.s32 0, %v220
    %v222 = vrot.slane %v90, %v221
    %v224 = vadd.f32 %v213, %v222
    %v225 = vxor.u32 %v224, 2147483648
    %v226 = vmul.f32 %v225, 1.442695
    %v227 = vpow.pop %v226
    %v228 = vadd.f32 %v227, 1.0
    %v229 = vrcp.pop %v228
    %v230 = vmul.f32 1.0, %v229
    %v231 = vtanh.pop %v224
    %233 = vrot.lane.b32.xlu0 %v101, 32
    %v234 = vpop.permute.xlu0 %233
    %v236 = vmul.f32 %v230, %v234
    %238 = vrot.lane.b32.xlu0 %v231, 64
    %v239 = vpop.permute.xlu0 %238
    %v241 = vmul.f32 %v230, %v239
    %243 = vrot.lane.b32.xlu0 %v241, 32
    %v244 = vpop.permute.xlu0 %243
    %v246 = vadd.f32 %v236, %v244
    %v247 = vtanh.pop %v246
    %249 = vrot.lane.b32.xlu0 %v247, 64
    %v250 = vpop.permute.xlu0 %249
    %v252 = vmul.f32 %v230, %v250
    %v253 = vpack.c.bf16 %v252, %v252
    %v254 = vpack.c.bf16 %v100, %v100
    %v259 = vunpack.c.l.b16 %v86
    %v260 = vunpack.c.l.b16 %v87
    %v261 = vunpack.c.l.b16 %v88
    %v262 = vunpack.c.l.b16 %v89
    %v263 = vpack.c.b16 %v260, %v259
    %v264 = vpack.c.b16 %v262, %v261
    %v268 = vsel %vm119, %v254, 0
    %270 = vmatprep.subr.bf16.mxu0 0
    %271 = vmatpush1.bf16.msra.mxu0 %v263
    %272 = vmatprep.subr.bf16.mxu0 0
    %273 = vmatpush1.bf16.msra.mxu0 %v264
    %274 = vmatprep.subr.bf16.mxu0 0
    %275 = vmatpush1.bf16.msra.mxu0 0
    %276 = vmatprep.subr.bf16.mxu0 0
    %277 = vmatpush1.bf16.msra.mxu0 0
    %278 = vmatprep.subr.bf16.mxu0 0
    %279 = vmatpush1.bf16.msra.mxu0 0
    %280 = vmatprep.subr.bf16.mxu0 0
    %281 = vmatpush1.bf16.msra.mxu0 0
    %282 = vmatprep.subr.bf16.mxu0 0
    %283 = vmatpush1.bf16.msra.mxu0 0
    %284 = vmatprep.subr.bf16.mxu0 0
    %285 = vmatpush1.bf16.msra.mxu0 0
    %286 = vmatprep.subr.bf16.mxu0 0
    %287 = vmatpush1.bf16.msra.mxu0 0
    %288 = vmatprep.subr.bf16.mxu0 0
    %289 = vmatpush1.bf16.msra.mxu0 0
    %290 = vmatprep.subr.bf16.mxu0 0
    %291 = vmatpush1.bf16.msra.mxu0 0
    %292 = vmatprep.subr.bf16.mxu0 0
    %293 = vmatpush1.bf16.msra.mxu0 0
    %294 = vmatprep.subr.bf16.mxu0 0
    %295 = vmatpush1.bf16.msra.mxu0 0
    %296 = vmatprep.subr.bf16.mxu0 0
    %297 = vmatpush1.bf16.msra.mxu0 0
    %298 = vmatprep.subr.bf16.mxu0 0
    %299 = vmatpush1.bf16.msra.mxu0 0
    %300 = vmatprep.subr.bf16.mxu0 0
    %301 = vmatpush1.bf16.msra.mxu0 0
    %302 = vmatprep.mubr.bf16.mxu0 0
    %303 = vmatmul.mubr.bf16.gmra.mrb[0].mxu0 %v268
    %v304 = vpop.f32.mrb[0].mxu0
    %v305 = vadd.f32 0.0, %v304
    %v306 = vpop.f32.mrb[0].mxu0
    %v307 = vpop.f32.mrb[0].mxu0
    %v308 = vpop.f32.mrb[0].mxu0
    %309 = vdwg.mxu0
    %311 = vrot.lane.b32.xlu0 %v253, 32
    %v312 = vpop.permute.xlu0 %311
    %v317 = vunpack.c.l.b16 %v77
    %v318 = vunpack.c.l.b16 %v78
    %v319 = vunpack.c.l.b16 %v79
    %v320 = vunpack.c.l.b16 %v80
    %v321 = vpack.c.b16 %v318, %v317
    %v322 = vpack.c.b16 %v320, %v319
    %v326 = vsel %vm119, %v312, 0
    %328 = vmatprep.subr.bf16.mxu0 0
    %329 = vmatpush1.bf16.msra.mxu0 %v321
    %330 = vmatprep.subr.bf16.mxu0 0
    %331 = vmatpush1.bf16.msra.mxu0 %v322
    %332 = vmatprep.subr.bf16.mxu0 0
    %333 = vmatpush1.bf16.msra.mxu0 0
    %334 = vmatprep.subr.bf16.mxu0 0
    %335 = vmatpush1.bf16.msra.mxu0 0
    %336 = vmatprep.subr.bf16.mxu0 0
    %337 = vmatpush1.bf16.msra.mxu0 0
    %338 = vmatprep.subr.bf16.mxu0 0
    %339 = vmatpush1.bf16.msra.mxu0 0
    %340 = vmatprep.subr.bf16.mxu0 0
    %341 = vmatpush1.bf16.msra.mxu0 0
    %342 = vmatprep.subr.bf16.mxu0 0
    %343 = vmatpush1.bf16.msra.mxu0 0
    %344 = vmatprep.subr.bf16.mxu0 0
    %345 = vmatpush1.bf16.msra.mxu0 0
    %346 = vmatprep.subr.bf16.mxu0 0
    %347 = vmatpush1.bf16.msra.mxu0 0
    %348 = vmatprep.subr.bf16.mxu0 0
    %349 = vmatpush1.bf16.msra.mxu0 0
    %350 = vmatprep.subr.bf16.mxu0 0
    %351 = vmatpush1.bf16.msra.mxu0 0
    %352 = vmatprep.subr.bf16.mxu0 0
    %353 = vmatpush1.bf16.msra.mxu0 0
    %354 = vmatprep.subr.bf16.mxu0 0
    %355 = vmatpush1.bf16.msra.mxu0 0
    %356 = vmatprep.subr.bf16.mxu0 0
    %357 = vmatpush1.bf16.msra.mxu0 0
    %358 = vmatprep.subr.bf16.mxu0 0
    %359 = vmatpush1.bf16.msra.mxu0 0
    %360 = vmatprep.mubr.bf16.mxu0 0
    %361 = vmatmul.mubr.bf16.gmra.mrb[0].mxu0 %v326
    %v362 = vpop.f32.mrb[0].mxu0
    %v363 = vadd.f32 %v305, %v362
    %v364 = vpop.f32.mrb[0].mxu0
    %v365 = vpop.f32.mrb[0].mxu0
    %v366 = vpop.f32.mrb[0].mxu0
    %367 = vdwg.mxu0
    %v369 = vlaneseq
    %v370 = vshrl.u32 %v369, 7
    %v371 = vsub.s32 0, %v370
    %v372 = vrot.slane %v92, %v371
    %v374 = vadd.f32 %v363, %v372
    %v375 = vxor.u32 %v374, 2147483648
    %v376 = vmul.f32 %v375, 1.442695
    %v377 = vpow.pop %v376
    %v378 = vadd.f32 %v377, 1.0
    %v379 = vrcp.pop %v378
    %v380 = vmul.f32 1.0, %v379
    %v381 = vtanh.pop %v374
    %383 = vrot.lane.b32.xlu0 %v103, 32
    %v384 = vpop.permute.xlu0 %383
    %v386 = vmul.f32 %v380, %v384
    %388 = vrot.lane.b32.xlu0 %v381, 64
    %v389 = vpop.permute.xlu0 %388
    %v391 = vmul.f32 %v380, %v389
    %393 = vrot.lane.b32.xlu0 %v391, 32
    %v394 = vpop.permute.xlu0 %393
    %v396 = vadd.f32 %v386, %v394
    %v397 = vtanh.pop %v396
    %399 = vrot.lane.b32.xlu0 %v397, 64
    %v400 = vpop.permute.xlu0 %399
    %v402 = vmul.f32 %v380, %v400
    %v403 = vpack.c.bf16 %v402, %v402
    %v405 = vlaneseq
    %v406 = vshrl.u32 %v405, 7
    %v407 = vsub.s32 0, %v406
    %v408 = vrot.slane %v97, %v407
    %411 = vrot.lane.b32.xlu0 %v403, 32
    %v412 = vpop.permute.xlu0 %411
    %v417 = vunpack.c.l.b16 %v93
    %v418 = vunpack.c.l.b16 %v94
    %v419 = vunpack.c.l.b16 %v95
    %v420 = vunpack.c.l.b16 %v96
    %v421 = vpack.c.b16 %v418, %v417
    %v422 = vpack.c.b16 %v420, %v419
    %v426 = vsel %vm119, %v412, 0
    %428 = vmatprep.subr.bf16.mxu0 0
    %429 = vmatpush1.bf16.msra.mxu0 %v421
    %430 = vmatprep.subr.bf16.mxu0 0
    %431 = vmatpush1.bf16.msra.mxu0 %v422
    %432 = vmatprep.subr.bf16.mxu0 0
    %433 = vmatpush1.bf16.msra.mxu0 0
    %434 = vmatprep.subr.bf16.mxu0 0
    %435 = vmatpush1.bf16.msra.mxu0 0
    %436 = vmatprep.subr.bf16.mxu0 0
    %437 = vmatpush1.bf16.msra.mxu0 0
    %438 = vmatprep.subr.bf16.mxu0 0
    %439 = vmatpush1.bf16.msra.mxu0 0
    %440 = vmatprep.subr.bf16.mxu0 0
    %441 = vmatpush1.bf16.msra.mxu0 0
    %442 = vmatprep.subr.bf16.mxu0 0
    %443 = vmatpush1.bf16.msra.mxu0 0
    %444 = vmatprep.subr.bf16.mxu0 0
    %445 = vmatpush1.bf16.msra.mxu0 0
    %446 = vmatprep.subr.bf16.mxu0 0
    %447 = vmatpush1.bf16.msra.mxu0 0
    %448 = vmatprep.subr.bf16.mxu0 0
    %449 = vmatpush1.bf16.msra.mxu0 0
    %450 = vmatprep.subr.bf16.mxu0 0
    %451 = vmatpush1.bf16.msra.mxu0 0
    %452 = vmatprep.subr.bf16.mxu0 0
    %453 = vmatpush1.bf16.msra.mxu0 0
    %454 = vmatprep.subr.bf16.mxu0 0
    %455 = vmatpush1.bf16.msra.mxu0 0
    %456 = vmatprep.subr.bf16.mxu0 0
    %457 = vmatpush1.bf16.msra.mxu0 0
    %458 = vmatprep.subr.bf16.mxu0 0
    %459 = vmatpush1.bf16.msra.mxu0 0
    %460 = vmatprep.mubr.bf16.mxu0 0
    %461 = vmatmul.mubr.bf16.gmra.mrb[0].mxu0 %v426
    %v462 = vpop.f32.mrb[0].mxu0
    %v463 = vadd.f32 %v408, %v462
    %v464 = vpop.f32.mrb[0].mxu0
    %v465 = vpop.f32.mrb[0].mxu0
    %v466 = vpop.f32.mrb[0].mxu0
    %467 = vdwg.mxu0
    %468 = vst [vmem:[%s8] sm:$0xff] %v463
    %470 = vrot.lane.b32.xlu0 %v252, 32
    %v471 = vpop.permute.xlu0 %470
    %473 = vst.msk [vmem:[%s9] sm:$0xff] %vm119, %v471
    %475 = vrot.lane.b32.xlu0 %v246, 96
    %v476 = vpop.permute.xlu0 %475
    %478 = vst.msk [vmem:[%s10] sm:$0xff] %vm119, %v476
    %480 = vrot.lane.b32.xlu0 %v402, 32
    %v481 = vpop.permute.xlu0 %480
    %s483 = scalar_lea.vmem %s9, 8
    %484 = vst.msk [vmem:[%s483] sm:$0xff] %vm119, %v481
    %486 = vrot.lane.b32.xlu0 %v396, 96
    %v487 = vpop.permute.xlu0 %486
    %s489 = scalar_lea.vmem %s10, 8
    %490 = vst.msk [vmem:[%s489] sm:$0xff] %vm119, %v487
    // Predicated region
    $region46: #{decoder_forward.1} parent=1 // pred_check
      _
    $region47: #{decoder_forward.1} parent=1 // pred_check_branch
      %492 = sbr.rel (0) target = $region49
    $region48: #{decoder_forward.1} parent=1 // pred_region
      _
    $region49: #{decoder_forward.1} parent=1 // pred_fallthru
      _
    // Predicated region
    $region50: #{decoder_forward.1} parent=1 // pred_check
      _
    $region51: #{decoder_forward.1} parent=1 // pred_check_branch
      %494 = sbr.rel (0) target = $region53
    $region52: #{decoder_forward.1} parent=1 // pred_region
      _
    $region53: #{decoder_forward.1} parent=1 // pred_fallthru
      _
    // Predicated region
    $region54: #{decoder_forward.1} parent=1 // pred_check
      _
    $region55: #{decoder_forward.1} parent=1 // pred_check_branch
      %496 = sbr.rel (0) target = $region57
    $region56: #{decoder_forward.1} parent=1 // pred_region
      _
    $region57: #{decoder_forward.1} parent=1 // pred_fallthru
      _
    // Predicated region
    $region58: #{decoder_forward.1} parent=1 // pred_check
      _
    $region59: #{decoder_forward.1} parent=1 // pred_check_branch
      %498 = sbr.rel (0) target = $region61
    $region60: #{decoder_forward.1} parent=1 // pred_region
      _
    $region61: #{decoder_forward.1} parent=1 // pred_fallthru
      _
    // Predicated region
    $region62: #{decoder_forward.1} parent=1 // pred_check
      _
    $region63: #{decoder_forward.1} parent=1 // pred_check_branch
      %500 = sbr.rel (0) target = $region65
    $region64: #{decoder_forward.1} parent=1 // pred_region
      _
    $region65: #{decoder_forward.1} parent=1 // pred_fallthru
      _
    // Predicated region
    $region66: #{decoder_forward.1} parent=1 // pred_check
      _
    $region67: #{decoder_forward.1} parent=1 // pred_check_branch
      %502 = sbr.rel (0) target = $region69
    $region68: #{decoder_forward.1} parent=1 // pred_region
      _
    $region69: #{decoder_forward.1} parent=1 // pred_fallthru
      _
    %503 = vsyncpa [#allocation3], 1
    %504 = vsyncpa [#allocation5], 1

</llo_original>
